<compile_context>
chip_gen: v6e
topology: v6e:2x2x1
jax: 0.10.0
libtpu: 0.0.40
codegen_flags: <defaults>
</compile_context>

<pallas_src>
import jax
import jax.numpy as jnp
from jax.experimental import pallas as pl
from jax.experimental.pallas import tpu as pltpu


def _conv1x1_kernel(x_ref, w_ref, o_ref):
    # x_ref: (1, C, tn)  -- channels on sublanes, pixels on lanes
    # w_ref: (C, C)      -- full weight, resident across the grid
    # o_ref: (1, C, tn)
    # out[o, p] = sum_c W[o, c] * x[c, p]  ==  W @ X   (no transpose needed)
    o_ref[0] = jnp.dot(
        w_ref[...], x_ref[0], preferred_element_type=jnp.float32
    ).astype(o_ref.dtype)


def _choose_pixel_tile(hw, c, itemsize, vmem_budget_bytes=8 * 1024 * 1024):
    """Largest lane-dense pixel tile (multiple of 128) within a VMEM budget.

    Budget accounts for double-buffered input + output tiles:
    2 buffers * 2 tensors * C * tn * itemsize.  Conservative enough to fit the
    v5e 16 MiB scoped default and the v7x 64 MiB physical VMEM without flags.
    """
    if hw < 128 or hw % 128 != 0:
        # Block last dim must be a multiple of 128 or the full extent; fall back
        # to full-extent pixel blocks (cheap for the small-C regime of this op).
        return hw
    max_tn_by_vmem = max(128, vmem_budget_bytes // (4 * c * itemsize))
    tn = min(hw, 16384, max_tn_by_vmem)
    return max(128, (tn // 128) * 128)


@jax.jit
def invertible_1x1_conv_forward(x, w_mat):
    """x: (B, C, H, W) float32, w_mat: (C, C) float32.

    Returns (out, log_det_jacobian) matching the PyTorch module forward.
    """
    B, C, H, W = x.shape
    HW = H * W

    # NCHW already has pixels contiguous in the last dims: pure reshape, no
    # transpose, no extra HBM traffic.
    x3 = x.reshape(B, C, HW)

    tn = _choose_pixel_tile(HW, C, x.dtype.itemsize)
    grid = (B, pl.cdiv(HW, tn))

    cost = pl.CostEstimate(
        flops=2 * B * HW * C * C,
        transcendentals=0,
        bytes_accessed=(2 * B * C * HW * x.dtype.itemsize
                        + C * C * w_mat.dtype.itemsize),
    )

    out3 = pl.pallas_call(
        _conv1x1_kernel,
        out_shape=jax.ShapeDtypeStruct((B, C, HW), x.dtype),
        grid_spec=pltpu.PrefetchScalarGridSpec(
            num_scalar_prefetch=0,
            grid=grid,
            in_specs=[
                pl.BlockSpec((1, C, tn), lambda b, j: (b, 0, j)),
                pl.BlockSpec((C, C), lambda b, j: (0, 0)),
            ],
            out_specs=pl.BlockSpec((1, C, tn), lambda b, j: (b, 0, j)),
        ),
        compiler_params=pltpu.CompilerParams(
            dimension_semantics=("parallel", "parallel"),
        ),
        cost_estimate=cost,
    )(x3, w_mat)

    out = out3.reshape(B, C, H, W)

    # log_det_jacobian = H * W * slogdet(W)[1]  (tiny CxC; parameter glue).
    _, logabsdet = jnp.linalg.slogdet(w_mat)
    log_det_jacobian = (H * W) * logabsdet

    return out, log_det_jacobian


if __name__ == "__main__":
    key = jax.random.PRNGKey(0)
    k_w, k_x = jax.random.split(key)

    B, C, H, W = 2, 4, 16, 16

    # Deterministic parameter init mirroring the module __init__:
    # W = qr(randn(C, C))[0], stored conceptually as (C, C, 1, 1); we keep (C, C).
    W0 = jax.random.normal(k_w, (C, C), dtype=jnp.float32)
    w_mat, _ = jnp.linalg.qr(W0)

    x = jax.random.normal(k_x, (B, C, H, W), dtype=jnp.float32)

    out, log_det = invertible_1x1_conv_forward(x, w_mat)
    out = jax.block_until_ready(out)
    log_det = jax.block_until_ready(log_det)

    # Pure-JAX reference (1x1 conv == einsum over channels).
    ref = jnp.einsum("oc,bchw->bohw", w_mat, x)
    assert jnp.allclose(out, ref, atol=1e-5, rtol=1e-5), "kernel mismatch"
    ref_logdet = (H * W) * jnp.linalg.slogdet(w_mat)[1]
    assert jnp.allclose(log_det, ref_logdet, atol=1e-5, rtol=1e-5)

    print("KERNEL_OK")
</pallas_src>

<mosaic_0001>
module attributes {stable_mosaic.version = 11 : i64} {
  func.func @_conv1x1_kernel(%arg0: i32, %arg1: i32, %arg2: memref<1x4x256xf32, #tpu.memory_space<vmem>>, %arg3: memref<4x4xf32, #tpu.memory_space<vmem>>, %arg4: memref<1x4x256xf32, #tpu.memory_space<vmem>>) attributes {dimension_semantics = [#tpu.dimension_semantics<parallel>, #tpu.dimension_semantics<parallel>], iteration_bounds = array<i64: 2, 1>, scalar_prefetch = 0 : i64, scratch_operands = 0 : i64, tpu.core_type = #tpu.core_type<tc>, window_params = [{transform_indices = @transform_0, window_bounds = array<i64: 1, 4, 256>}, {pipeline_mode = #tpu.pipeline_mode<synchronous>, transform_indices = @transform_1, window_bounds = array<i64: 4, 4>}, {transform_indices = @transform_2, window_bounds = array<i64: 1, 4, 256>}]} {
    %c0 = arith.constant 0 : index
    %c0_0 = arith.constant 0 : index
    %0 = vector.load %arg3[%c0, %c0_0] : memref<4x4xf32, #tpu.memory_space<vmem>>, vector<4x4xf32>
    %c0_1 = arith.constant 0 : index
    %c0_2 = arith.constant 0 : index
    %c0_3 = arith.constant 0 : index
    %1 = vector.load %arg2[%c0_1, %c0_2, %c0_3] : memref<1x4x256xf32, #tpu.memory_space<vmem>>, vector<1x4x256xf32>
    %2 = vector.shape_cast %1 : vector<1x4x256xf32> to vector<4x256xf32>
    %cst = arith.constant dense<0.000000e+00> : vector<4x256xf32>
    %3 = tpu.matmul %0, %2, %cst {dimension_numbers = #tpu.dot_dimension_numbers<[1], [0], [0], [1], [0, 0, 1, 1], [], []>} : vector<4x4xf32>, vector<4x256xf32>, vector<4x256xf32> -> vector<4x256xf32>
    %c0_4 = arith.constant 0 : index
    %c0_5 = arith.constant 0 : index
    %c0_6 = arith.constant 0 : index
    %4 = vector.load %arg4[%c0_4, %c0_5, %c0_6] : memref<1x4x256xf32, #tpu.memory_space<vmem>>, vector<1x4x256xf32>
    %5 = vector.shape_cast %4 : vector<1x4x256xf32> to vector<4x256xf32>
    %6 = vector.shape_cast %3 : vector<4x256xf32> to vector<1x4x256xf32>
    tpu.vector_store %arg4[%c0_4, %c0_5, %c0_6], %6 {strides = array<i32>} : memref<1x4x256xf32, #tpu.memory_space<vmem>>, vector<1x4x256xf32>,
    return
  }
  func.func @transform_0(%arg0: i32, %arg1: i32) -> (i32, i32, i32) {
    %c0_i32 = arith.constant 0 : i32
    %c0_i32_0 = arith.constant 0 : i32
    return %arg0, %c0_i32, %arg1 : i32, i32, i32
  }
  func.func @transform_1(%arg0: i32, %arg1: i32) -> (i32, i32) {
    %c0_i32 = arith.constant 0 : i32
    %c0_i32_0 = arith.constant 0 : i32
    %c0_i32_1 = arith.constant 0 : i32
    return %c0_i32, %c0_i32_0 : i32, i32
  }
  func.func @transform_2(%arg0: i32, %arg1: i32) -> (i32, i32, i32) {
    %c0_i32 = arith.constant 0 : i32
    %c0_i32_0 = arith.constant 0 : i32
    return %arg0, %c0_i32, %arg1 : i32, i32, i32
  }
}

</mosaic_0001>

<llo_original>
// kernel: custom-call.2
$region0: #{custom-call.2}
  %s0 = inlined_call_operand.vmem [shape: f32[4,4], index: 0, kind: input, shape index: {}]
  %s1 = inlined_call_operand.vmem [shape: f32[4,4], index: 1, kind: output, shape index: {0}]
  %s2 = inlined_call_operand.hbm [shape: s32[4], index: 2, kind: output, shape index: {1}]
  %s3 = inlined_call_operand.hbm [shape: s32[4], index: 3, kind: output, shape index: {2}]
  %4 = xla_tuple %s1, %s2, %s3
  $region1: #{custom-call.2} parent=0
    #allocation0 [shape = 'u8[4096]{0}', space=vmem, size = 0x1000, scoped, tag = 'operand span for operand 0']
    #allocation1 [shape = 'u8[2048]{0}', space=vmem, size = 0x800, scoped, tag = 'packed  for operand 0']
    #allocation2 [shape = 'u8[4096]{0}', space=vmem, size = 0x1000, scoped, tag = 'operand span for operand 1']
    #allocation3 [shape = 'u8[2048]{0}', space=vmem, size = 0x800, scoped, tag = 'packed  for operand 1']
    #allocation4 [shape = 'u8[4096]{0}', space=vmem, size = 0x1000, scoped, tag = 'operand span for operand 2']
    #allocation5 [shape = 'u8[512]{0}', space=vmem, size = 0x400, scoped, tag = 'packed  for operand 2']
    #allocation6 [shape = 's32[1]{0}', space=sflag, size = 0x4, scoped, tag = 'scoped memory for custom-call.2']
    #allocation7 [shape = 'u8[4096]{0}', space=vmem, size = 0x1000, scoped, tag = 'operand span for operand 3']
    #allocation8 [shape = 'u8[512]{0}', space=vmem, size = 0x400, scoped, tag = 'packed  for operand 3']
    #allocation9 [shape = 's32[1]{0}', space=sflag, size = 0x4, scoped, tag = 'scoped memory for custom-call.2']
    #allocation10 [shape = 's32[4,128]{1,0}', space=vmem, size = 0x1000, scoped, tag = 'scratch for permutations']
    %5 = vsyncpa [#allocation6], 0
    %6 = vsyncpa [#allocation9], 0
    %p8 = scmp.gt.s32.totalorder 4, 0
    // Predicated region
    $region2: #{custom-call.2} parent=1 // pred_check
      %p9 = pneg %p8
    $region3: #{custom-call.2} parent=1 // pred_check_branch
      %11 = sbr.rel (%p9) target = $region5
    $region4: #{custom-call.2} parent=1 // pred_region
      %s12 = sshra.s32 4, 3
      %p13 = scmp.gt.s32.totalorder %s12, 0
      // Predicated region
      $region6: #{custom-call.2} parent=4 // pred_check
        %p14 = pneg %p13
      $region7: #{custom-call.2} parent=4 // pred_check_branch
        %16 = sbr.rel (%p14) target = $region9
      $region8: #{custom-call.2} parent=4 // pred_region
        %s17 = ssub.s32 %s12, 1
        %s18 = smul.u32 %s17, 128
        %s19 = sshra.s32 %s18, 4
        %s20 = scalar_lea.vmem %s0, %s19
        %v21 = vld [vmem:[%s0] sm:$0xff]
        // While loop
        $region10: #{custom-call.2} parent=8 // loop_pre_header
          _
        $region11: #{custom-call.2} parent=8 // loop_header
          %s22 = sphi %s0, %s44
          %s23 = sphi [#allocation1], %s45
          %v24 = vphi %v21, %v46
          %s25 = ssub.s32 %s20, 64
          %p26 = scmp.gt.s32.totalorder %s22, %s25
        $region12: #{custom-call.2} parent=8 // loop_header_branch
          %28 = sbr.rel (%p26) target = $region16
        $region13: #{custom-call.2} parent=8 // loop_body
          %29 = vst [vmem:[%s23] sm:$0xff] %v24
          %v30 = vld [vmem:[%s22 + $0x8] sm:$0xff]
          %31 = vst [vmem:[%s23 + $0x8] sm:$0xff] %v30
          %v32 = vld [vmem:[%s22 + $0x10] sm:$0xff]
          %33 = vst [vmem:[%s23 + $0x10] sm:$0xff] %v32
          %v34 = vld [vmem:[%s22 + $0x18] sm:$0xff]
          %35 = vst [vmem:[%s23 + $0x18] sm:$0xff] %v34
          %v36 = vld [vmem:[%s22 + $0x20] sm:$0xff]
          %37 = vst [vmem:[%s23 + $0x20] sm:$0xff] %v36
          %v38 = vld [vmem:[%s22 + $0x28] sm:$0xff]
          %39 = vst [vmem:[%s23 + $0x28] sm:$0xff] %v38
          %v40 = vld [vmem:[%s22 + $0x30] sm:$0xff]
          %41 = vst [vmem:[%s23 + $0x30] sm:$0xff] %v40
          %v42 = vld [vmem:[%s22 + $0x38] sm:$0xff]
          %43 = vst [vmem:[%s23 + $0x38] sm:$0xff] %v42
        $region14: #{custom-call.2} parent=8 // loop_footer
          %s44 = scalar_lea.vmem %s22, 64
          %s45 = scalar_lea.vmem %s23, 64
          %v46 = vld [vmem:[%s22 + $0x40] sm:$0xff]
        $region15: #{custom-call.2} parent=8 // loop_footer_branch
          %47 = sbr.rel target = $region11
        $region16: #{custom-call.2} parent=8 // loop_exit
          _
        // While loop
        $region17: #{custom-call.2} parent=8 // loop_pre_header
          _
        $region18: #{custom-call.2} parent=8 // loop_header
          %s48 = sphi %s22, %s56
          %s49 = sphi %s23, %s57
          %v50 = vphi %v24, %v50
          %p51 = scmp.gt.s32.totalorder %s48, %s20
        $region19: #{custom-call.2} parent=8 // loop_header_branch
          %53 = sbr.rel (%p51) target = $region23
        $region20: #{custom-call.2} parent=8 // loop_body
          %v54 = vld [vmem:[%s48] sm:$0xff]
          %55 = vst [vmem:[%s49] sm:$0xff] %v54
        $region21: #{custom-call.2} parent=8 // loop_footer
          %s56 = scalar_lea.vmem %s48, 8
          %s57 = scalar_lea.vmem %s49, 8
        $region22: #{custom-call.2} parent=8 // loop_footer_branch
          %58 = sbr.rel target = $region18
        $region23: #{custom-call.2} parent=8 // loop_exit
          _
      $region9: #{custom-call.2} parent=4 // pred_fallthru
        _
      %s59 = sand.u32 4, 7
      %s60 = sshll.u32 1, %s59
      %s61 = ssub.s32 %s60, 1
      %s62 = smul.u32 %s12, 128
      %s63 = sshra.s32 %s62, 4
      %s64 = scalar_lea.vmem [#allocation1], %s63
      %s65 = smul.u32 %s12, 128
      %s66 = sshra.s32 %s65, 4
      %s67 = scalar_lea.vmem %s0, %s66
      %v68 = vld [vmem:[%s67] sm:%s61]
      %69 = vst [vmem:[%s64] sm:%s61] %v68
    $region5: #{custom-call.2} parent=1 // pred_fallthru
      _
    %s71 = sshll.u32 1, 4
    %s72 = ssub.s32 %s71, 1
    %v73 = vld [vmem:[#allocation1] sm:%s72]
    %74 = vst [vmem:[#allocation0] sm:%s72] %v73
    %v75 = vld [vmem:[#allocation0] sm:$0xff]
    %76 = vst [vmem:[#allocation2] sm:$0xff] %v75
    %77 = vst [vmem:[#allocation4] sm:$0x1] 0
    %v78 = vlaneseq
    %v79 = vshrl.u32 %v78, 7
    %v80 = vmov %v79
    %82 = vst [vmem:[#allocation10] sm:$0xff] %v80
    loop: start=0, step=1, limit=4
    $region25: #{custom-call.2} parent=1 // loop_pre_header
      _
    $region26: #{custom-call.2} parent=1 // loop_header
      %s84 = sphi 0, %s88
      %p85 = scmp.ge.s32.totalorder %s84, 4
    $region27: #{custom-call.2} parent=1 // loop_header_branch
      %87 = sbr.rel (%p85) target = $region31
    $region28: #{custom-call.2} parent=1 // loop_body
      %v89 = vstv %s84
      %v90 = vlaneseq
      %v91 = vshrl.u32 %v90, 7
      %v92 = vmov %v91
      %v93 = vld [vmem:[#allocation2] sm:$0xff]
      %v94 = vand.u32 2147483647, %v93
      %v96 = vstv %s84
      %vm97 = vcmp.ge.s32.totalorder %v92, %v96
      %vm98 = vcmp.lt.s32.totalorder %v92, 4
      %vm99 = vmand %vm97, %vm98
      %vm100 = vcmp.lt.f32.partialorder -inf, %v94
      %vm101 = vmand %vm99, %vm100
      %v102 = vsel %vm101, %v92, %v89
      %v103 = vsel %vm101, %v94, -inf
      %v104 = vrot.slane %v103, 1
      %v105 = vrot.slane %v102, 1
      %vm106 = vcmp.ge.f32.partialorder %v104, %v103
      %v107 = vsel %vm106, %v104, %v103
      %v108 = vsel %vm106, %v105, %v102
      %v109 = vrot.slane %v104, 1
      %v110 = vrot.slane %v105, 1
      %vm111 = vcmp.ge.f32.partialorder %v109, %v107
      %v112 = vsel %vm111, %v109, %v107
      %v113 = vsel %vm111, %v110, %v108
      %v114 = vrot.slane %v109, 1
      %v115 = vrot.slane %v110, 1
      %vm116 = vcmp.ge.f32.partialorder %v114, %v112
      %v117 = vsel %vm116, %v114, %v112
      %v118 = vsel %vm116, %v115, %v113
      %v119 = vrot.slane %v114, 1
      %v120 = vrot.slane %v115, 1
      %vm121 = vcmp.ge.f32.partialorder %v119, %v117
      %v122 = vsel %vm121, %v119, %v117
      %v123 = vsel %vm121, %v120, %v118
      %v124 = vrot.slane %v119, 1
      %v125 = vrot.slane %v120, 1
      %vm126 = vcmp.ge.f32.partialorder %v124, %v122
      %v127 = vsel %vm126, %v124, %v122
      %v128 = vsel %vm126, %v125, %v123
      %v129 = vrot.slane %v124, 1
      %v130 = vrot.slane %v125, 1
      %vm131 = vcmp.ge.f32.partialorder %v129, %v127
      %v132 = vsel %vm131, %v129, %v127
      %v133 = vsel %vm131, %v130, %v128
      %v134 = vrot.slane %v129, 1
      %v135 = vrot.slane %v130, 1
      %vm136 = vcmp.ge.f32.partialorder %v134, %v132
      %v137 = vsel %vm136, %v134, %v132
      %v138 = vsel %vm136, %v135, %v133
      %s139 = ssub.s32 128, %s84
      %140 = vrot.lane.b32.xlu0 %v138, %s139
      %v141 = vpop.permute.xlu0 %140
      %s142 = vtos %v141
      %v143 = vstv %s84
      %v144 = vlaneseq
      %v145 = vand.u32 %v144, 127
      %vm146 = vcmp.eq.s32.totalorder %v145, %v143
      %v147 = vstv %s142
      %v148 = vld [vmem:[#allocation4] ss:$0 sm:$0xff]
      %v149 = vsel %vm146, %v147, %v148
      %150 = vst [vmem:[#allocation4] sm:$0x1] %v149
      %s151 = scalar_lea.vmem [#allocation2], %s84
      %s152 = scalar_lea.vmem [#allocation2], %s142
      %v153 = vld [vmem:[%s151] ss:$0 sm:$0xff]
      %v154 = vld [vmem:[%s152] ss:$0 sm:$0xff]
      %155 = vst [vmem:[%s152] sm:$0x1] %v153
      %156 = vst [vmem:[%s151] sm:$0x1] %v154
      %s157 = scalar_lea.vmem [#allocation10], %s84
      %s158 = scalar_lea.vmem [#allocation10], %s142
      %v159 = vld [vmem:[%s157] ss:$0 sm:$0xff]
      %v160 = vld [vmem:[%s158] ss:$0 sm:$0xff]
      %161 = vst [vmem:[%s158] sm:$0x1] %v159
      %162 = vst [vmem:[%s157] sm:$0x1] %v160
      %vm163 = vcmp.ne.f32.partialorder %v154, 0.0
      %vm164 = vmand %vm146, %vm163
      %v165 = vsel %vm164, %v154, 1.0
      %v166 = vlaneseq
      %v167 = vand.u32 %v166, 127
      %v168 = vstv %s84
      %vm169 = vcmp.gt.s32.totalorder %v167, %v168
      %v170 = vsel %vm169, %v154, 0.0
      %v171 = vlaneseq
      %v172 = vshrl.u32 %v171, 7
      %v173 = vmov %v172
      %v174 = vld [vmem:[#allocation2] sm:$0xff]
      %v176 = vstv %s84
      %vm177 = vcmp.gt.s32.totalorder %v173, %v176
      %v178 = vsel %vm177, %v165, 1.0
      %v179 = vrcp.pop %v178
      %v180 = vmul.f32 %v174, %v179
      %vm181 = vmand %vm177, %vm146
      %v182 = vsel %vm181, %v180, 0.0
      %183 = vadd.xlane.f32.xlu0 %v182
      %v184 = vpop.xlane.xlu0 %183
      %v185 = vmul.f32 %v184, %v170
      %v186 = vsub.f32 %v180, %v185
      %187 = vst [vmem:[#allocation2] sm:$0xff] %v186
    $region29: #{custom-call.2} parent=1 // loop_footer
      %s88 = sadd.s32 1, %s84
    $region30: #{custom-call.2} parent=1 // loop_footer_branch
      %83 = sbr.rel target = $region26
    $region31: #{custom-call.2} parent=1 // loop_exit
      _
    %v188 = vld [vmem:[#allocation10] sm:$0xff]
    %s189 = scalar_lea.vmem [#allocation10], 8
    %s190 = scalar_lea.vmem [#allocation10], 16
    %s191 = scalar_lea.vmem [#allocation10], 24
    %s192 = scalar_lea.vmem [#allocation10], 32
    %s193 = scalar_lea.vmem [#allocation10], 40
    %s194 = scalar_lea.vmem [#allocation10], 48
    %s195 = scalar_lea.vmem [#allocation10], 56
    %s196 = scalar_lea.vmem [#allocation10], 64
    %s197 = scalar_lea.vmem [#allocation10], 72
    %s198 = scalar_lea.vmem [#allocation10], 80
    %s199 = scalar_lea.vmem [#allocation10], 88
    %s200 = scalar_lea.vmem [#allocation10], 96
    %s201 = scalar_lea.vmem [#allocation10], 104
    %s202 = scalar_lea.vmem [#allocation10], 112
    %s203 = scalar_lea.vmem [#allocation10], 120
    %204 = vxpose.xlu0.b32.start [1/16] %v188, 128
    %205 = vxpose.xlu0.b32.cont [2/16] 0, 128
    %206 = vxpose.xlu0.b32.cont [3/16] 0, 128
    %207 = vxpose.xlu0.b32.cont [4/16] 0, 128
    %208 = vxpose.xlu0.b32.cont [5/16] 0, 128
    %209 = vxpose.xlu0.b32.cont [6/16] 0, 128
    %210 = vxpose.xlu0.b32.cont [7/16] 0, 128
    %211 = vxpose.xlu0.b32.cont [8/16] 0, 128
    %212 = vxpose.xlu0.b32.cont [9/16] 0, 128
    %213 = vxpose.xlu0.b32.cont [10/16] 0, 128
    %214 = vxpose.xlu0.b32.cont [11/16] 0, 128
    %215 = vxpose.xlu0.b32.cont [12/16] 0, 128
    %216 = vxpose.xlu0.b32.cont [13/16] 0, 128
    %217 = vxpose.xlu0.b32.cont [14/16] 0, 128
    %218 = vxpose.xlu0.b32.cont [15/16] 0, 128
    %219 = vxpose.xlu0.b32.end [16/16] 0, 128
    %v220 = vpop.trf.xlu0
    %v221 = vpop.trf.xlu0
    %v222 = vpop.trf.xlu0
    %v223 = vpop.trf.xlu0
    %v224 = vpop.trf.xlu0
    %v225 = vpop.trf.xlu0
    %v226 = vpop.trf.xlu0
    %v227 = vpop.trf.xlu0
    %v228 = vpop.trf.xlu0
    %v229 = vpop.trf.xlu0
    %v230 = vpop.trf.xlu0
    %v231 = vpop.trf.xlu0
    %v232 = vpop.trf.xlu0
    %v233 = vpop.trf.xlu0
    %v234 = vpop.trf.xlu0
    %v235 = vpop.trf.xlu0
    %236 = vst [vmem:[#allocation7] sm:$0x1] %v220
    %s238 = sshll.u32 1, 4
    %s239 = ssub.s32 %s238, 1
    %v241 = vld [vmem:[#allocation2] sm:%s239]
    %s242 = sshll.u32 1, 4
    %s243 = ssub.s32 %s242, 1
    %244 = vst [vmem:[#allocation3] sm:%s243] %v241
    %s246 = sshll.u32 1, 1
    %s247 = ssub.s32 %s246, 1
    %v249 = vld [vmem:[#allocation4] sm:%s247]
    %s250 = sshll.u32 1, 1
    %s251 = ssub.s32 %s250, 1
    %252 = vst [vmem:[#allocation5] sm:%s251] %v249
    %s254 = sshll.u32 1, 1
    %s255 = ssub.s32 %s254, 1
    %v257 = vld [vmem:[#allocation7] sm:%s255]
    %s258 = sshll.u32 1, 1
    %s259 = ssub.s32 %s258, 1
    %260 = vst [vmem:[#allocation8] sm:%s259] %v257
    %p262 = scmp.gt.s32.totalorder 4, 0
    // Predicated region
    $region32: #{custom-call.2} parent=1 // pred_check
      %p263 = pneg %p262
    $region33: #{custom-call.2} parent=1 // pred_check_branch
      %265 = sbr.rel (%p263) target = $region35
    $region34: #{custom-call.2} parent=1 // pred_region
      %s266 = sshra.s32 4, 3
      %p267 = scmp.gt.s32.totalorder %s266, 0
      // Predicated region
      $region36: #{custom-call.2} parent=34 // pred_check
        %p268 = pneg %p267
      $region37: #{custom-call.2} parent=34 // pred_check_branch
        %270 = sbr.rel (%p268) target = $region39
      $region38: #{custom-call.2} parent=34 // pred_region
        %s271 = ssub.s32 %s266, 1
        %s272 = smul.u32 %s271, 128
        %s273 = sshra.s32 %s272, 4
        %s274 = scalar_lea.vmem [#allocation3], %s273
        %v275 = vld [vmem:[#allocation3] sm:$0xff]
        // While loop
        $region40: #{custom-call.2} parent=38 // loop_pre_header
          _
        $region41: #{custom-call.2} parent=38 // loop_header
          %s276 = sphi [#allocation3], %s298
          %s277 = sphi %s1, %s299
          %v278 = vphi %v275, %v300
          %s279 = ssub.s32 %s274, 64
          %p280 = scmp.gt.s32.totalorder %s276, %s279
        $region42: #{custom-call.2} parent=38 // loop_header_branch
          %282 = sbr.rel (%p280) target = $region46
        $region43: #{custom-call.2} parent=38 // loop_body
          %283 = vst [vmem:[%s277] sm:$0xff] %v278
          %v284 = vld [vmem:[%s276 + $0x8] sm:$0xff]
          %285 = vst [vmem:[%s277 + $0x8] sm:$0xff] %v284
          %v286 = vld [vmem:[%s276 + $0x10] sm:$0xff]
          %287 = vst [vmem:[%s277 + $0x10] sm:$0xff] %v286
          %v288 = vld [vmem:[%s276 + $0x18] sm:$0xff]
          %289 = vst [vmem:[%s277 + $0x18] sm:$0xff] %v288
          %v290 = vld [vmem:[%s276 + $0x20] sm:$0xff]
          %291 = vst [vmem:[%s277 + $0x20] sm:$0xff] %v290
          %v292 = vld [vmem:[%s276 + $0x28] sm:$0xff]
          %293 = vst [vmem:[%s277 + $0x28] sm:$0xff] %v292
          %v294 = vld [vmem:[%s276 + $0x30] sm:$0xff]
          %295 = vst [vmem:[%s277 + $0x30] sm:$0xff] %v294
          %v296 = vld [vmem:[%s276 + $0x38] sm:$0xff]
          %297 = vst [vmem:[%s277 + $0x38] sm:$0xff] %v296
        $region44: #{custom-call.2} parent=38 // loop_footer
          %s298 = scalar_lea.vmem %s276, 64
          %s299 = scalar_lea.vmem %s277, 64
          %v300 = vld [vmem:[%s276 + $0x40] sm:$0xff]
        $region45: #{custom-call.2} parent=38 // loop_footer_branch
          %301 = sbr.rel target = $region41
        $region46: #{custom-call.2} parent=38 // loop_exit
          _
        // While loop
        $region47: #{custom-call.2} parent=38 // loop_pre_header
          _
        $region48: #{custom-call.2} parent=38 // loop_header
          %s302 = sphi %s276, %s310
          %s303 = sphi %s277, %s311
          %v304 = vphi %v278, %v304
          %p305 = scmp.gt.s32.totalorder %s302, %s274
        $region49: #{custom-call.2} parent=38 // loop_header_branch
          %307 = sbr.rel (%p305) target = $region53
        $region50: #{custom-call.2} parent=38 // loop_body
          %v308 = vld [vmem:[%s302] sm:$0xff]
          %309 = vst [vmem:[%s303] sm:$0xff] %v308
        $region51: #{custom-call.2} parent=38 // loop_footer
          %s310 = scalar_lea.vmem %s302, 8
          %s311 = scalar_lea.vmem %s303, 8
        $region52: #{custom-call.2} parent=38 // loop_footer_branch
          %312 = sbr.rel target = $region48
        $region53: #{custom-call.2} parent=38 // loop_exit
          _
      $region39: #{custom-call.2} parent=34 // pred_fallthru
        _
      %s313 = sand.u32 4, 7
      %s314 = sshll.u32 1, %s313
      %s315 = ssub.s32 %s314, 1
      %s316 = smul.u32 %s266, 128
      %s317 = sshra.s32 %s316, 4
      %s318 = scalar_lea.vmem %s1, %s317
      %s319 = smul.u32 %s266, 128
      %s320 = sshra.s32 %s319, 4
      %s321 = scalar_lea.vmem [#allocation3], %s320
      %v322 = vld [vmem:[%s321] sm:%s315]
      %323 = vst [vmem:[%s318] sm:%s315] %v322
    $region35: #{custom-call.2} parent=1 // pred_fallthru
      _
    // Predicated region
    $region54: #{custom-call.2} parent=1 // pred_check
      _
    $region55: #{custom-call.2} parent=1 // pred_check_branch
      %325 = sbr.rel (0) target = $region57
    $region56: #{custom-call.2} parent=1 // pred_region
      %s327 = ssub.s32 16, 16
      %328 = vsyncadd [#allocation6], %s327
      %s329 = sshll.u32 [#allocation5], 4
      %s330 = int_to_ptr.vmem [resolvable:$true] %s329
      %332 = dma.vmem_to_hbm [thread:$0]  %s330, 16, %s2, [#allocation6]
    $region57: #{custom-call.2} parent=1 // pred_fallthru
      _
    // Predicated region
    $region58: #{custom-call.2} parent=1 // pred_check
      _
    $region59: #{custom-call.2} parent=1 // pred_check_branch
      %334 = sbr.rel (0) target = $region61
    $region60: #{custom-call.2} parent=1 // pred_region
      %s336 = ssub.s32 16, 16
      %337 = vsyncadd [#allocation9], %s336
      %s338 = sshll.u32 [#allocation8], 4
      %s339 = int_to_ptr.vmem [resolvable:$true] %s338
      %341 = dma.vmem_to_hbm [thread:$0]  %s339, 16, %s3, [#allocation9]
    $region61: #{custom-call.2} parent=1 // pred_fallthru
      _
    // Predicated region
    $region62: #{custom-call.2} parent=1 // pred_check
      _
    $region63: #{custom-call.2} parent=1 // pred_check_branch
      %343 = sbr.rel (0) target = $region65
    $region64: #{custom-call.2} parent=1 // pred_region
      %344 = dma.done [#allocation6], 16
    $region65: #{custom-call.2} parent=1 // pred_fallthru
      _
    // Predicated region
    $region66: #{custom-call.2} parent=1 // pred_check
      _
    $region67: #{custom-call.2} parent=1 // pred_check_branch
      %346 = sbr.rel (0) target = $region69
    $region68: #{custom-call.2} parent=1 // pred_region
      %347 = dma.done [#allocation9], 16
    $region69: #{custom-call.2} parent=1 // pred_fallthru
      _
    %348 = vsyncpa [#allocation6], 1
    %349 = vsyncpa [#allocation9], 1

// kernel: invertible_1x1_conv_forward.1
$region0: #{invertible_1x1_conv_forward.1}
  #allocation0 [shape = 'u32[]', space=smem, size = 0x4, offset = 0x4, fixed_abs, tag = 'smem constant byte address 0x4 - core index']
  #allocation1 [shape = 'u32[144,128]{1,0:T(1,128)}', space=vmem, size = 0x12000, scoped, tag = 'internal scratch']
  %s0 = inlined_call_operand.vmem [shape: f32[2,4,256], index: 0, kind: input, shape index: {}]
  %s1 = inlined_call_operand.vmem [shape: f32[4,4], index: 1, kind: input, shape index: {}]
  %s2 = inlined_call_operand.vmem [shape: f32[2,4,256], index: 2, kind: output, shape index: {}]
  %s3 = sld [smem:[#allocation0]]
  $region41: #{invertible_1x1_conv_forward.1} parent=0
    _
  %s5 = ssub.s32 1, %s3
  %s6 = scalar_select 0, %s5, %s3
  loop: start=0, step=1, limit=4
  $region2: #{invertible_1x1_conv_forward.1} parent=0 // loop_pre_header
    _
  $region3: #{invertible_1x1_conv_forward.1} parent=0 // loop_header
    %s8 = sphi 0, %s12
    %p9 = scmp.ge.s32.totalorder %s8, 4
    %s15 = sphi 0, %s27
    %s16 = sphi 0, %s23
    %s17 = sphi 0, %s15
    %s18 = sphi 0, %s16
    %s19 = sphi 0, %s17
    %s20 = sphi 0, %s18
    %s32 = sphi 0, %s34
    %s35 = sphi 0, %s32
    %s36 = sphi 0, %s35
    %s52 = sphi 0, %s36
    %s56 = sphi 0, %s56
    %s58 = sphi 0, %s56
    %s59 = sphi 0, %s58
    %s73 = sphi 0, %s59
    %s81 = sphi 0, %s83
    %s84 = sphi 0, %s81
    %s85 = sphi 0, %s84
    %s101 = sphi 0, %s85
  $region4: #{invertible_1x1_conv_forward.1} parent=0 // loop_header_branch
    %11 = sbr.rel (%p9) target = $region8
  $region5: #{invertible_1x1_conv_forward.1} parent=0 // loop_body
    %s13 = ssub.s32 %s8, 1
    %s14 = ssub.s32 %s8, 2
    %s21 = sadd.s32 1, %s16
    %p22 = scmp.ge.s32.totalorder %s21, 1
    %s23 = scalar_select %p22, 0, %s21
    %s24 = sadd.s32 1, %s15
    %s25 = scalar_select %p22, %s24, %s15
    %p26 = scmp.ge.s32.totalorder %s25, 2
    %s27 = scalar_select %p26, 0, %s25
    %s28 = ssub.s32 %s15, %s27
    %s29 = ssub.s32 %s16, %s23
    %s30 = sor.u32 %s28, %s29
    %p31 = scmp.eq.s32.totalorder %s30, 0
    %s33 = sadd.s32 %s32, 1
    %s34 = scalar_select %p31, %s32, %s33
    %p37 = pneg %p31
    %p38 = scmp.eq.s32.totalorder %s8, 1
    %p39 = por %p37, %p38
    %p40 = scmp.ne.s32.totalorder %s32, %s35
    %p41 = scmp.eq.s32.totalorder %s8, 0
    %p42 = por %p40, %p41
    %p43 = scmp.ne.s32.totalorder %s32, %s35
    %p44 = scmp.eq.s32.totalorder %s13, 1
    %p45 = por %p43, %p44
    %p46 = scmp.ne.s32.totalorder %s35, %s36
    %p47 = scmp.eq.s32.totalorder %s13, 0
    %p48 = por %p46, %p47
    %p49 = scmp.ne.s32.totalorder %s35, %s36
    %p50 = scmp.eq.s32.totalorder %s14, 1
    %p51 = por %p49, %p50
    %p53 = scmp.ne.s32.totalorder %s36, %s52
    %p54 = scmp.eq.s32.totalorder %s14, 0
    %p55 = por %p53, %p54
    %s57 = sadd.s32 %s56, 1
    %p60 = scmp.eq.s32.totalorder %s8, 1
    %p61 = scmp.ne.s32.totalorder %s56, %s58
    %p62 = scmp.eq.s32.totalorder %s8, 0
    %p63 = por %p61, %p62
    %p64 = scmp.ne.s32.totalorder %s56, %s58
    %p65 = scmp.eq.s32.totalorder %s13, 1
    %p66 = por %p64, %p65
    %p67 = scmp.ne.s32.totalorder %s58, %s59
    %p68 = scmp.eq.s32.totalorder %s13, 0
    %p69 = por %p67, %p68
    %p70 = scmp.ne.s32.totalorder %s58, %s59
    %p71 = scmp.eq.s32.totalorder %s14, 1
    %p72 = por %p70, %p71
    %p74 = scmp.ne.s32.totalorder %s59, %s73
    %p75 = scmp.eq.s32.totalorder %s14, 0
    %p76 = por %p74, %p75
    %s77 = ssub.s32 %s15, %s27
    %s78 = ssub.s32 %s16, %s23
    %s79 = sor.u32 %s77, %s78
    %p80 = scmp.eq.s32.totalorder %s79, 0
    %s82 = sadd.s32 %s81, 1
    %s83 = scalar_select %p80, %s81, %s82
    %p86 = pneg %p80
    %p87 = scmp.eq.s32.totalorder %s8, 1
    %p88 = por %p86, %p87
    %p89 = scmp.ne.s32.totalorder %s81, %s84
    %p90 = scmp.eq.s32.totalorder %s8, 0
    %p91 = por %p89, %p90
    %p92 = scmp.ne.s32.totalorder %s81, %s84
    %p93 = scmp.eq.s32.totalorder %s13, 1
    %p94 = por %p92, %p93
    %p95 = scmp.ne.s32.totalorder %s84, %s85
    %p96 = scmp.eq.s32.totalorder %s13, 0
    %p97 = por %p95, %p96
    %p98 = scmp.ne.s32.totalorder %s84, %s85
    %p99 = scmp.eq.s32.totalorder %s14, 1
    %p100 = por %p98, %p99
    %p102 = scmp.ne.s32.totalorder %s85, %s101
    %p103 = scmp.eq.s32.totalorder %s14, 0
    %p104 = por %p102, %p103
    %p105 = scmp.le.s32.totalorder 1, %s8
    %p106 = scmp.lt.s32.totalorder %s8, 3
    %p107 = pnand %p105, %p106
    %p108 = pneg %p107
    // Predicated region
    $region9: #{invertible_1x1_conv_forward.1} parent=5 // pred_check
      _
    $region10: #{invertible_1x1_conv_forward.1} parent=5 // pred_check_branch
      %110 = sbr.rel (%p107) target = $region12
    $region11: #{invertible_1x1_conv_forward.1} parent=5 // pred_region
      %s111 = ssub.s32 %s8, 1
      // Predicated region
      $region13: #{invertible_1x1_conv_forward.1} parent=11 // pred_check
        %p112 = pneg %p69
      $region14: #{invertible_1x1_conv_forward.1} parent=11 // pred_check_branch
        %114 = sbr.rel (%p112) target = $region16
      $region15: #{invertible_1x1_conv_forward.1} parent=11 // pred_region
        _
      $region16: #{invertible_1x1_conv_forward.1} parent=11 // pred_fallthru
        _
    $region12: #{invertible_1x1_conv_forward.1} parent=5 // pred_fallthru
      _
    %p115 = scmp.lt.s32.totalorder %s8, 2
    // Predicated region
    $region17: #{invertible_1x1_conv_forward.1} parent=5 // pred_check
      %p116 = pneg %p115
    $region18: #{invertible_1x1_conv_forward.1} parent=5 // pred_check_branch
      %118 = sbr.rel (%p116) target = $region20
    $region19: #{invertible_1x1_conv_forward.1} parent=5 // pred_region
      // Predicated region
      $region21: #{invertible_1x1_conv_forward.1} parent=19 // pred_check
        %p119 = pneg %p42
      $region22: #{invertible_1x1_conv_forward.1} parent=19 // pred_check_branch
        %121 = sbr.rel (%p119) target = $region24
      $region23: #{invertible_1x1_conv_forward.1} parent=19 // pred_region
        %s122 = smul.u32 2, %s16
        %p123 = scmp.lt.s32.totalorder %s15, 1
        %s124 = scalar_select %p123, %s15, 1
        %p125 = scmp.lt.s32.totalorder %s122, 1
        %s126 = scalar_select %p125, %s122, 1
        %s127 = smul.addr %s124, 2
        %s128 = sadd.s32 %s126, %s127
        %s129 = smul.addr %s128, 4
        %s130 = scalar_lea.vmem %s0, %s129
        %s131 = smul.u32 2, %s16
      $region24: #{invertible_1x1_conv_forward.1} parent=19 // pred_fallthru
        _
    $region20: #{invertible_1x1_conv_forward.1} parent=5 // pred_fallthru
      _
    %p132 = scmp.le.s32.totalorder 1, %s8
    %p133 = scmp.lt.s32.totalorder %s8, 3
    %p134 = pnand %p132, %p133
    %p135 = pneg %p134
    // Predicated region
    $region25: #{invertible_1x1_conv_forward.1} parent=5 // pred_check
      _
    $region26: #{invertible_1x1_conv_forward.1} parent=5 // pred_check_branch
      %137 = sbr.rel (%p134) target = $region28
    $region27: #{invertible_1x1_conv_forward.1} parent=5 // pred_region
      %s138 = ssub.s32 %s8, 1
      %s139 = smul.u32 2, %s18
      %p140 = scmp.lt.s32.totalorder %s17, 1
      %s141 = scalar_select %p140, %s17, 1
      %p142 = scmp.lt.s32.totalorder %s139, 1
      %s143 = scalar_select %p142, %s139, 1
      %s144 = smul.addr %s141, 2
      %s145 = sadd.s32 %s143, %s144
      %s146 = smul.addr %s145, 4
      %s147 = scalar_lea.vmem %s0, %s146
      %p148 = pneg %p48
      %p149 = pneg %p45
      %p150 = pneg %p69
      %p151 = pneg %p66
      %p152 = pneg %p97
      %p153 = pneg %p94
      %s154 = smul.u32 2, %s18
      %p155 = scmp.lt.s32.totalorder %s17, 1
      %s156 = scalar_select %p155, %s17, 1
      %p157 = scmp.lt.s32.totalorder %s154, 1
      %s158 = scalar_select %p157, %s154, 1
      %s159 = smul.addr %s156, 2
      %s160 = sadd.s32 %s158, %s159
      %s161 = smul.addr %s160, 4
      %s162 = scalar_lea.vmem %s2, %s161
      %s163 = smul.u32 2, %s18
      %p164 = scmp.lt.s32.totalorder %s17, 1
      %s165 = scalar_select %p164, %s17, 1
      %p166 = scmp.lt.s32.totalorder %s163, 1
      %s167 = scalar_select %p166, %s163, 1
      %s168 = smul.addr %s165, 2
      %s169 = sadd.s32 %s167, %s168
      %s170 = smul.addr %s169, 4
      %s171 = scalar_lea.vmem %s0, %s170
      %s172 = smul.u32 2, %s18
      %s173 = smul.u32 2, %s18
      %p174 = scmp.lt.s32.totalorder %s17, 1
      %s175 = scalar_select %p174, %s17, 1
      %p176 = scmp.lt.s32.totalorder %s173, 1
      %s177 = scalar_select %p176, %s173, 1
      %s178 = smul.addr %s175, 2
      %s179 = sadd.s32 %s177, %s178
      %s180 = smul.addr %s179, 4
      %s181 = scalar_lea.vmem %s2, %s180
      %s182 = smul.u32 2, %s18
      %v183 = vld [vmem:[%s1] sm:$0xf]
      %v184 = vld [vmem:[%s171] sm:$0xff]
      %v186 = vcombine.high %v184, %v184
      %vm187 = vcmask 31744
      %v189 = vsel %vm187, %v183, 0
      %vm191 = vcmask 1043456
      %v192 = vsel %vm191, %v184, 0
      %v194 = vsel %vm191, %v186, 0
      %196 = vmatprep.subr.mxu0 0.0
      %197 = vmatpush1.msra.mxu0 0.0
      %198 = vmatprep.subr.mxu0 0.0
      %199 = vmatpush1.msra.mxu0 0.0
      %200 = vmatprep.subr.mxu0 0.0
      %201 = vmatpush1.msra.mxu0 0.0
      %202 = vmatprep.subr.mxu0 0.0
      %203 = vmatpush1.msra.mxu0 0.0
      %204 = vmatprep.subr.mxu0 0.0
      %205 = vmatpush1.msra.mxu0 0.0
      %206 = vmatprep.subr.mxu0 0.0
      %207 = vmatpush1.msra.mxu0 0.0
      %208 = vmatprep.subr.mxu0 0.0
      %209 = vmatpush1.msra.mxu0 0.0
      %210 = vmatprep.subr.mxu0 0.0
      %211 = vmatpush1.msra.mxu0 0.0
      %212 = vmatprep.subr.mxu0 0.0
      %213 = vmatpush1.msra.mxu0 0.0
      %214 = vmatprep.subr.mxu0 0.0
      %215 = vmatpush1.msra.mxu0 0.0
      %216 = vmatprep.subr.mxu0 0.0
      %217 = vmatpush1.msra.mxu0 0.0
      %218 = vmatprep.subr.mxu0 0.0
      %219 = vmatpush1.msra.mxu0 0.0
      %220 = vmatprep.subr.mxu0 0.0
      %221 = vmatpush1.msra.mxu0 0.0
      %222 = vmatprep.subr.mxu0 0.0
      %223 = vmatpush1.msra.mxu0 0.0
      %224 = vmatprep.subr.mxu0 0.0
      %225 = vmatpush1.msra.mxu0 0.0
      %226 = vmatprep.subr.mxu0 %v194
      %227 = vmatpush1.msra.mxu0 %v192
      %228 = vmatprep.subr.mxu0 0.0
      %229 = vmatpush2.msra.mxu0 0.0
      %230 = vmatprep.subr.mxu0 0.0
      %231 = vmatpush2.msra.mxu0 0.0
      %232 = vmatprep.subr.mxu0 0.0
      %233 = vmatpush2.msra.mxu0 0.0
      %234 = vmatprep.subr.mxu0 0.0
      %235 = vmatpush2.msra.mxu0 0.0
      %236 = vmatprep.subr.mxu0 0.0
      %237 = vmatpush2.msra.mxu0 0.0
      %238 = vmatprep.subr.mxu0 0.0
      %239 = vmatpush2.msra.mxu0 0.0
      %240 = vmatprep.subr.mxu0 0.0
      %241 = vmatpush2.msra.mxu0 0.0
      %242 = vmatprep.subr.mxu0 0.0
      %243 = vmatpush2.msra.mxu0 0.0
      %244 = vmatprep.subr.mxu0 0.0
      %245 = vmatpush2.msra.mxu0 0.0
      %246 = vmatprep.subr.mxu0 0.0
      %247 = vmatpush2.msra.mxu0 0.0
      %248 = vmatprep.subr.mxu0 0.0
      %249 = vmatpush2.msra.mxu0 0.0
      %250 = vmatprep.subr.mxu0 0.0
      %251 = vmatpush2.msra.mxu0 0.0
      %252 = vmatprep.subr.mxu0 0.0
      %253 = vmatpush2.msra.mxu0 0.0
      %254 = vmatprep.subr.mxu0 0.0
      %255 = vmatpush2.msra.mxu0 0.0
      %256 = vmatprep.subr.mxu0 0.0
      %257 = vmatpush2.msra.mxu0 0.0
      %258 = vmatprep.subr.mxu0 0.0
      %259 = vmatpush2.msra.mxu0 0.0
      %260 = vmatprep.mubr.f32.mxu0 0.0
      %261 = vmatmul.mubr.f32.gmra.mxu0 %v189
      %v262 = vpop.f32.mrf.mxu0
      %v263 = vadd.f32 0.0, %v262
      %v264 = vpop.f32.mrf.mxu0
      %v265 = vadd.f32 0.0, %v264
      %266 = vdwg.mxu0
      %v269 = vcombine.low %v263, %v265
      %271 = vst [vmem:[%s181] sm:$0xff] %v269
      %s272 = smul.u32 2, %s18
      %p273 = scmp.lt.s32.totalorder %s17, 1
      %s274 = scalar_select %p273, %s17, 1
      %p275 = scmp.lt.s32.totalorder %s272, 1
      %s276 = scalar_select %p275, %s272, 1
      %s277 = smul.addr %s274, 2
      %s278 = sadd.s32 %s276, %s277
      %s279 = smul.addr %s278, 4
      %s280 = scalar_lea.vmem %s2, %s279
      // Predicated region
      $region29: #{invertible_1x1_conv_forward.1} parent=27 // pred_check
        %p281 = pneg %p94
      $region30: #{invertible_1x1_conv_forward.1} parent=27 // pred_check_branch
        %283 = sbr.rel (%p281) target = $region32
      $region31: #{invertible_1x1_conv_forward.1} parent=27 // pred_region
        %s284 = smul.u32 2, %s18
      $region32: #{invertible_1x1_conv_forward.1} parent=27 // pred_fallthru
        _
    $region28: #{invertible_1x1_conv_forward.1} parent=5 // pred_fallthru
      _
    %p285 = scmp.le.s32.totalorder 2, %s8
    // Predicated region
    $region33: #{invertible_1x1_conv_forward.1} parent=5 // pred_check
      %p286 = pneg %p285
    $region34: #{invertible_1x1_conv_forward.1} parent=5 // pred_check_branch
      %288 = sbr.rel (%p286) target = $region36
    $region35: #{invertible_1x1_conv_forward.1} parent=5 // pred_region
      %s289 = ssub.s32 %s8, 2
      // Predicated region
      $region37: #{invertible_1x1_conv_forward.1} parent=35 // pred_check
        %p290 = pneg %p100
      $region38: #{invertible_1x1_conv_forward.1} parent=35 // pred_check_branch
        %292 = sbr.rel (%p290) target = $region40
      $region39: #{invertible_1x1_conv_forward.1} parent=35 // pred_region
        %s293 = smul.u32 2, %s20
        %p294 = scmp.lt.s32.totalorder %s19, 1
        %s295 = scalar_select %p294, %s19, 1
        %p296 = scmp.lt.s32.totalorder %s293, 1
        %s297 = scalar_select %p296, %s293, 1
        %s298 = smul.addr %s295, 2
        %s299 = sadd.s32 %s297, %s298
        %s300 = smul.addr %s299, 4
        %s301 = scalar_lea.vmem %s2, %s300
      $region40: #{invertible_1x1_conv_forward.1} parent=35 // pred_fallthru
        _
    $region36: #{invertible_1x1_conv_forward.1} parent=5 // pred_fallthru
      _
  $region6: #{invertible_1x1_conv_forward.1} parent=0 // loop_footer
    %s12 = sadd.s32 1, %s8
  $region7: #{invertible_1x1_conv_forward.1} parent=0 // loop_footer_branch
    %7 = sbr.rel target = $region3
  $region8: #{invertible_1x1_conv_forward.1} parent=0 // loop_exit
    _

</llo_original>
